<compile_context>
chip_gen: v6e
topology: v6e:2x2x1
jax: 0.10.0
libtpu: 0.0.40
codegen_flags: <defaults>
</compile_context>

<pallas_src>
import functools

import jax
import jax.numpy as jnp
from jax.experimental import pallas as pl
from jax.experimental.pallas import tpu as pltpu

block_size = 8
n_embd = 32


def head_kernel(x_ref, wq_ref, wk_ref, wv_ref, o_ref):
    # x_ref:  (TB, T, C)   one tile of examples
    # w*_ref: (C, H)        resident weights
    # o_ref:  (TB, T, H)
    TB, T, C = x_ref.shape
    H = wq_ref.shape[1]

    # Fused projections: one (TB*T, C) @ (C, H) matmul per projection.
    x2d = x_ref[...].reshape(TB * T, C)
    q = jnp.dot(x2d, wq_ref[...], preferred_element_type=jnp.float32).reshape(TB, T, H)
    k = jnp.dot(x2d, wk_ref[...], preferred_element_type=jnp.float32).reshape(TB, T, H)
    v = jnp.dot(x2d, wv_ref[...], preferred_element_type=jnp.float32).reshape(TB, T, H)

    # Scaled attention scores (scale uses C = n_embd, exactly as in the module).
    scale = C ** -0.5
    s = jnp.einsum("bth,bsh->bts", q, k,
                   preferred_element_type=jnp.float32) * scale

    # Causal (lower-triangular) mask built in-kernel with 2-D iota.
    row = jax.lax.broadcasted_iota(jnp.int32, (T, T), 0)
    col = jax.lax.broadcasted_iota(jnp.int32, (T, T), 1)
    causal = (row >= col)[None, :, :]
    s = jnp.where(causal, s, -jnp.inf)

    # Numerically stable softmax along the key axis.
    m = jnp.max(s, axis=-1, keepdims=True)
    p = jnp.exp(s - m)
    wei = p / jnp.sum(p, axis=-1, keepdims=True)

    out = jnp.einsum("bts,bsh->bth", wei.astype(v.dtype), v,
                     preferred_element_type=jnp.float32)
    o_ref[...] = out.astype(o_ref.dtype)


def _pick_tile_b(B, max_tb=256):
    """Largest tile size <= max_tb that evenly divides B (no padded blocks)."""
    tb = min(B, max_tb)
    while B % tb != 0:
        tb -= 1
    return tb


@functools.partial(jax.jit, static_argnames=())
def head_forward(x, wq, wk, wv):
    B, T, C = x.shape
    H = wq.shape[1]
    TB = _pick_tile_b(B)
    grid = (B // TB,)

    return pl.pallas_call(
        head_kernel,
        out_shape=jax.ShapeDtypeStruct((B, T, H), x.dtype),
        grid=grid,
        in_specs=[
            pl.BlockSpec((TB, T, C), lambda i: (i, 0, 0)),   # stream x tiles
            pl.BlockSpec((C, H), lambda i: (0, 0)),          # Wq resident
            pl.BlockSpec((C, H), lambda i: (0, 0)),          # Wk resident
            pl.BlockSpec((C, H), lambda i: (0, 0)),          # Wv resident
        ],
        out_specs=pl.BlockSpec((TB, T, H), lambda i: (i, 0, 0)),
        compiler_params=pltpu.CompilerParams(
            dimension_semantics=("parallel",)),
    )(x, wq, wk, wv)


def init_params(key, head_size, dtype=jnp.float32):
    # Mimics nn.Linear(n_embd, head_size, bias=False): U(-1/sqrt(fan_in), +)
    kq, kk, kv = jax.random.split(key, 3)
    bound = 1.0 / (n_embd ** 0.5)
    wq = jax.random.uniform(kq, (n_embd, head_size), dtype, -bound, bound)
    wk = jax.random.uniform(kk, (n_embd, head_size), dtype, -bound, bound)
    wv = jax.random.uniform(kv, (n_embd, head_size), dtype, -bound, bound)
    return wq, wk, wv


if __name__ == "__main__":
    key = jax.random.PRNGKey(0)
    kx, kp = jax.random.split(key)

    B, T = 2, block_size          # (2, 8)
    head_size = 16
    x = jax.random.normal(kx, (B, T, n_embd), dtype=jnp.float32)
    wq, wk, wv = init_params(kp, head_size)

    y = head_forward(x, wq, wk, wv)
    jax.block_until_ready(y)

    # Plain-JAX reference matching the PyTorch module.
    q = x @ wq
    k = x @ wk
    v = x @ wv
    wei = (q @ jnp.swapaxes(k, -2, -1)) * (n_embd ** -0.5)
    mask = jnp.tril(jnp.ones((T, T), dtype=bool))
    wei = jnp.where(mask[None, :, :], wei, -jnp.inf)
    wei = jax.nn.softmax(wei, axis=-1)
    ref = wei @ v

    assert y.shape == (B, T, head_size)
    assert jnp.allclose(y, ref, atol=1e-5, rtol=1e-5)

    print("KERNEL_OK")
</pallas_src>

<mosaic_0001>
module attributes {stable_mosaic.version = 11 : i64} {
  func.func @head_kernel(%arg0: i32, %arg1: memref<2x8x32xf32, #tpu.memory_space<vmem>>, %arg2: memref<32x16xf32, #tpu.memory_space<vmem>>, %arg3: memref<32x16xf32, #tpu.memory_space<vmem>>, %arg4: memref<32x16xf32, #tpu.memory_space<vmem>>, %arg5: memref<2x8x16xf32, #tpu.memory_space<vmem>>) attributes {dimension_semantics = [#tpu.dimension_semantics<parallel>], iteration_bounds = array<i64: 1>, scalar_prefetch = 0 : i64, scratch_operands = 0 : i64, tpu.core_type = #tpu.core_type<tc>, window_params = [{transform_indices = @transform_0, window_bounds = array<i64: 2, 8, 32>}, {pipeline_mode = #tpu.pipeline_mode<synchronous>, transform_indices = @transform_1, window_bounds = array<i64: 32, 16>}, {pipeline_mode = #tpu.pipeline_mode<synchronous>, transform_indices = @transform_2, window_bounds = array<i64: 32, 16>}, {pipeline_mode = #tpu.pipeline_mode<synchronous>, transform_indices = @transform_3, window_bounds = array<i64: 32, 16>}, {transform_indices = @transform_4, window_bounds = array<i64: 2, 8, 16>}]} {
    %c0 = arith.constant 0 : index
    %c0_0 = arith.constant 0 : index
    %c0_1 = arith.constant 0 : index
    %0 = vector.load %arg1[%c0, %c0_0, %c0_1] : memref<2x8x32xf32, #tpu.memory_space<vmem>>, vector<2x8x32xf32>
    %1 = vector.shape_cast %0 : vector<2x8x32xf32> to vector<16x32xf32>
    %c0_2 = arith.constant 0 : index
    %c0_3 = arith.constant 0 : index
    %2 = vector.load %arg2[%c0_2, %c0_3] : memref<32x16xf32, #tpu.memory_space<vmem>>, vector<32x16xf32>
    %cst = arith.constant dense<0.000000e+00> : vector<16x16xf32>
    %3 = tpu.matmul %1, %2, %cst {dimension_numbers = #tpu.dot_dimension_numbers<[1], [0], [0], [1], [0, 0, 1, 1], [], []>} : vector<16x32xf32>, vector<32x16xf32>, vector<16x16xf32> -> vector<16x16xf32>
    %4 = vector.shape_cast %3 : vector<16x16xf32> to vector<2x8x16xf32>
    %c0_4 = arith.constant 0 : index
    %c0_5 = arith.constant 0 : index
    %5 = vector.load %arg3[%c0_4, %c0_5] : memref<32x16xf32, #tpu.memory_space<vmem>>, vector<32x16xf32>
    %cst_6 = arith.constant dense<0.000000e+00> : vector<16x16xf32>
    %6 = tpu.matmul %1, %5, %cst_6 {dimension_numbers = #tpu.dot_dimension_numbers<[1], [0], [0], [1], [0, 0, 1, 1], [], []>} : vector<16x32xf32>, vector<32x16xf32>, vector<16x16xf32> -> vector<16x16xf32>
    %7 = vector.shape_cast %6 : vector<16x16xf32> to vector<2x8x16xf32>
    %c0_7 = arith.constant 0 : index
    %c0_8 = arith.constant 0 : index
    %8 = vector.load %arg4[%c0_7, %c0_8] : memref<32x16xf32, #tpu.memory_space<vmem>>, vector<32x16xf32>
    %cst_9 = arith.constant dense<0.000000e+00> : vector<16x16xf32>
    %9 = tpu.matmul %1, %8, %cst_9 {dimension_numbers = #tpu.dot_dimension_numbers<[1], [0], [0], [1], [0, 0, 1, 1], [], []>} : vector<16x32xf32>, vector<32x16xf32>, vector<16x16xf32> -> vector<16x16xf32>
    %10 = vector.shape_cast %9 : vector<16x16xf32> to vector<2x8x16xf32>
    "tpu.trace_start"() <{level = 10 : i32, message = "bth,bsh->bts"}> : () -> ()
    %cst_10 = arith.constant dense<0.000000e+00> : vector<2x8x8xf32>
    %11 = tpu.matmul %4, %7, %cst_10 {dimension_numbers = #tpu.dot_dimension_numbers<[2], [2], [1], [1], [0, 0, 0, 1, 1, 1], [0], [0]>} : vector<2x8x16xf32>, vector<2x8x16xf32>, vector<2x8x8xf32> -> vector<2x8x8xf32>
    "tpu.trace_stop"() : () -> ()
    %cst_11 = arith.constant 0.176776692 : f32
    %12 = vector.broadcast %cst_11 : f32 to vector<2x8x8xf32>
    %13 = arith.mulf %11, %12 : vector<2x8x8xf32>
    %14 = tpu.iota {dimensions = array<i32: 0>} : vector<8x8xi32>
    %15 = tpu.iota {dimensions = array<i32: 1>} : vector<8x8xi32>
    %16 = arith.cmpi sge, %14, %15 : vector<8x8xi32>
    %17 = vector.shape_cast %16 : vector<8x8xi1> to vector<1x8x8xi1>
    %cst_12 = arith.constant 0xFF800000 : f32
    %18 = vector.shape_cast %17 : vector<1x8x8xi1> to vector<1x8x8xi1>
    %19 = vector.broadcast %18 : vector<1x8x8xi1> to vector<2x8x8xi1>
    %20 = vector.broadcast %cst_12 : f32 to vector<2x8x8xf32>
    %21 = arith.select %19, %13, %20 : vector<2x8x8xi1>, vector<2x8x8xf32>
    %cst_13 = arith.constant dense<0xFF800000> : vector<2x8xf32>
    %22 = vector.multi_reduction <maximumf>, %21, %cst_13 [2] : vector<2x8x8xf32> to vector<2x8xf32>
    %23 = vector.shape_cast %22 : vector<2x8xf32> to vector<2x8x1xf32>
    %24 = vector.broadcast %23 : vector<2x8x1xf32> to vector<2x8x8xf32>
    %25 = arith.subf %21, %24 : vector<2x8x8xf32>
    %26 = math.exp %25 : vector<2x8x8xf32>
    %cst_14 = arith.constant dense<0.000000e+00> : vector<2x8xf32>
    %27 = vector.multi_reduction <add>, %26, %cst_14 [2] : vector<2x8x8xf32> to vector<2x8xf32>
    %28 = vector.shape_cast %27 : vector<2x8xf32> to vector<2x8x1xf32>
    %29 = vector.broadcast %28 : vector<2x8x1xf32> to vector<2x8x8xf32>
    %30 = arith.divf %26, %29 : vector<2x8x8xf32>
    "tpu.trace_start"() <{level = 10 : i32, message = "bts,bsh->bth"}> : () -> ()
    %cst_15 = arith.constant dense<0.000000e+00> : vector<2x8x16xf32>
    %31 = tpu.matmul %30, %10, %cst_15 {dimension_numbers = #tpu.dot_dimension_numbers<[2], [1], [1], [2], [0, 0, 0, 1, 1, 2], [0], [0]>} : vector<2x8x8xf32>, vector<2x8x16xf32>, vector<2x8x16xf32> -> vector<2x8x16xf32>
    "tpu.trace_stop"() : () -> ()
    %c0_16 = arith.constant 0 : index
    %c0_17 = arith.constant 0 : index
    %c0_18 = arith.constant 0 : index
    %32 = vector.load %arg5[%c0_16, %c0_17, %c0_18] : memref<2x8x16xf32, #tpu.memory_space<vmem>>, vector<2x8x16xf32>
    tpu.vector_store %arg5[%c0_16, %c0_17, %c0_18], %31 {strides = array<i32>} : memref<2x8x16xf32, #tpu.memory_space<vmem>>, vector<2x8x16xf32>,
    return
  }
  func.func @transform_0(%arg0: i32) -> (i32, i32, i32) {
    %c0_i32 = arith.constant 0 : i32
    %c0_i32_0 = arith.constant 0 : i32
    %c0_i32_1 = arith.constant 0 : i32
    return %arg0, %c0_i32, %c0_i32_0 : i32, i32, i32
  }
  func.func @transform_1(%arg0: i32) -> (i32, i32) {
    %c0_i32 = arith.constant 0 : i32
    %c0_i32_0 = arith.constant 0 : i32
    %c0_i32_1 = arith.constant 0 : i32
    return %c0_i32, %c0_i32_0 : i32, i32
  }
  func.func @transform_2(%arg0: i32) -> (i32, i32) {
    %c0_i32 = arith.constant 0 : i32
    %c0_i32_0 = arith.constant 0 : i32
    %c0_i32_1 = arith.constant 0 : i32
    return %c0_i32, %c0_i32_0 : i32, i32
  }
  func.func @transform_3(%arg0: i32) -> (i32, i32) {
    %c0_i32 = arith.constant 0 : i32
    %c0_i32_0 = arith.constant 0 : i32
    %c0_i32_1 = arith.constant 0 : i32
    return %c0_i32, %c0_i32_0 : i32, i32
  }
  func.func @transform_4(%arg0: i32) -> (i32, i32, i32) {
    %c0_i32 = arith.constant 0 : i32
    %c0_i32_0 = arith.constant 0 : i32
    %c0_i32_1 = arith.constant 0 : i32
    return %arg0, %c0_i32, %c0_i32_0 : i32, i32, i32
  }
}

</mosaic_0001>

<llo_original>
// kernel: head_forward.1
$region0: #{head_forward.1}
  #allocation0 [shape = 'u32[]', space=smem, size = 0x4, offset = 0x4, fixed_abs, tag = 'smem constant byte address 0x4 - core index']
  #allocation1 [shape = 'u32[144,128]{1,0:T(1,128)}', space=vmem, size = 0x12000, scoped, tag = 'internal scratch']
  %s0 = inlined_call_operand.vmem [shape: f32[2,8,32], index: 0, kind: input, shape index: {}]
  %s1 = inlined_call_operand.vmem [shape: f32[32,16], index: 1, kind: input, shape index: {}]
  %s2 = inlined_call_operand.vmem [shape: f32[32,16], index: 2, kind: input, shape index: {}]
  %s3 = inlined_call_operand.vmem [shape: f32[32,16], index: 3, kind: input, shape index: {}]
  %s4 = inlined_call_operand.hbm [shape: f32[2,8,16], index: 4, kind: output, shape index: {}]
  %s5 = sld [smem:[#allocation0]]
  $region26: #{head_forward.1} parent=0
    _
  %s7 = ssub.s32 1, %s5
  %s8 = scalar_select 0, %s7, %s5
  $region1: #{head_forward.1} parent=0
    #allocation2 [shape = 'u8[8192]{0}', space=vmem, size = 0x2000, scoped, tag = 'output window, operand 0, single buffered']
    #allocation3 [shape = 's32[1]{0}', space=sflag, size = 0x4, scoped, tag = 'scoped memory for head_forward.1']
    %9 = vsyncpa [#allocation3], 0
    // Predicated region
    $region2: #{head_forward.1} parent=1 // pred_check
      _
    $region3: #{head_forward.1} parent=1 // pred_check_branch
      %11 = sbr.rel (0) target = $region5
    $region4: #{head_forward.1} parent=1 // pred_region
      _
    $region5: #{head_forward.1} parent=1 // pred_fallthru
      _
    // Predicated region
    $region6: #{head_forward.1} parent=1 // pred_check
      _
    $region7: #{head_forward.1} parent=1 // pred_check_branch
      %13 = sbr.rel (0) target = $region9
    $region8: #{head_forward.1} parent=1 // pred_region
      _
    $region9: #{head_forward.1} parent=1 // pred_fallthru
      _
    // Predicated region
    $region10: #{head_forward.1} parent=1 // pred_check
      _
    $region11: #{head_forward.1} parent=1 // pred_check_branch
      %15 = sbr.rel (0) target = $region13
    $region12: #{head_forward.1} parent=1 // pred_region
      _
    $region13: #{head_forward.1} parent=1 // pred_fallthru
      _
    // Predicated region
    $region14: #{head_forward.1} parent=1 // pred_check
      _
    $region15: #{head_forward.1} parent=1 // pred_check_branch
      %17 = sbr.rel (0) target = $region17
    $region16: #{head_forward.1} parent=1 // pred_region
      _
    $region17: #{head_forward.1} parent=1 // pred_fallthru
      _
    %v18 = vld [vmem:[%s0] sm:$0xff]
    %v19 = vld [vmem:[%s0 + $0x8] sm:$0xff]
    %v20 = vld [vmem:[%s1] sm:$0xff]
    %v21 = vld [vmem:[%s1 + $0x8] sm:$0xff]
    %v22 = vld [vmem:[%s1 + $0x10] sm:$0xff]
    %v23 = vld [vmem:[%s1 + $0x18] sm:$0xff]
    %vm24 = vcmask 261120
    %v26 = vsel %vm24, %v18, 0
    %v29 = vsel %vm24, %v19, 0
    %31 = vmatprep.subr.mxu0 0.0
    %32 = vmatpush1.msra.mxu0 0.0
    %33 = vmatprep.subr.mxu0 0.0
    %34 = vmatpush1.msra.mxu0 0.0
    %35 = vmatprep.subr.mxu0 0.0
    %36 = vmatpush1.msra.mxu0 0.0
    %37 = vmatprep.subr.mxu0 0.0
    %38 = vmatpush1.msra.mxu0 0.0
    %39 = vmatprep.subr.mxu0 0.0
    %40 = vmatpush1.msra.mxu0 0.0
    %41 = vmatprep.subr.mxu0 0.0
    %42 = vmatpush1.msra.mxu0 0.0
    %43 = vmatprep.subr.mxu0 0.0
    %44 = vmatpush1.msra.mxu0 0.0
    %45 = vmatprep.subr.mxu0 0.0
    %46 = vmatpush1.msra.mxu0 0.0
    %47 = vmatprep.subr.mxu0 0.0
    %48 = vmatpush1.msra.mxu0 0.0
    %49 = vmatprep.subr.mxu0 0.0
    %50 = vmatpush1.msra.mxu0 0.0
    %51 = vmatprep.subr.mxu0 0.0
    %52 = vmatpush1.msra.mxu0 0.0
    %53 = vmatprep.subr.mxu0 0.0
    %54 = vmatpush1.msra.mxu0 0.0
    %55 = vmatprep.subr.mxu0 0.0
    %56 = vmatpush1.msra.mxu0 %v23
    %57 = vmatprep.subr.mxu0 0.0
    %58 = vmatpush1.msra.mxu0 %v22
    %59 = vmatprep.subr.mxu0 0.0
    %60 = vmatpush1.msra.mxu0 %v21
    %61 = vmatprep.subr.mxu0 0.0
    %62 = vmatpush1.msra.mxu0 %v20
    %63 = vmatprep.subr.mxu0 0.0
    %64 = vmatpush2.msra.mxu0 0.0
    %65 = vmatprep.subr.mxu0 0.0
    %66 = vmatpush2.msra.mxu0 0.0
    %67 = vmatprep.subr.mxu0 0.0
    %68 = vmatpush2.msra.mxu0 0.0
    %69 = vmatprep.subr.mxu0 0.0
    %70 = vmatpush2.msra.mxu0 0.0
    %71 = vmatprep.subr.mxu0 0.0
    %72 = vmatpush2.msra.mxu0 0.0
    %73 = vmatprep.subr.mxu0 0.0
    %74 = vmatpush2.msra.mxu0 0.0
    %75 = vmatprep.subr.mxu0 0.0
    %76 = vmatpush2.msra.mxu0 0.0
    %77 = vmatprep.subr.mxu0 0.0
    %78 = vmatpush2.msra.mxu0 0.0
    %79 = vmatprep.subr.mxu0 0.0
    %80 = vmatpush2.msra.mxu0 0.0
    %81 = vmatprep.subr.mxu0 0.0
    %82 = vmatpush2.msra.mxu0 0.0
    %83 = vmatprep.subr.mxu0 0.0
    %84 = vmatpush2.msra.mxu0 0.0
    %85 = vmatprep.subr.mxu0 0.0
    %86 = vmatpush2.msra.mxu0 0.0
    %87 = vmatprep.subr.mxu0 0.0
    %88 = vmatpush2.msra.mxu0 0.0
    %89 = vmatprep.subr.mxu0 0.0
    %90 = vmatpush2.msra.mxu0 0.0
    %91 = vmatprep.subr.mxu0 0.0
    %92 = vmatpush2.msra.mxu0 0.0
    %93 = vmatprep.subr.mxu0 0.0
    %94 = vmatpush2.msra.mxu0 0.0
    %95 = vmatprep.mubr.f32.mxu0 0.0
    %96 = vmatmul.mubr.f32.gmra.mxu0 %v26
    %v97 = vpop.f32.mrf.mxu0
    %v98 = vadd.f32 0.0, %v97
    %v99 = vpop.f32.mrf.mxu0
    %100 = vmatprep.mubr.f32.mxu0 0.0
    %101 = vmatmul.mubr.f32.gmra.mxu0 %v29
    %v102 = vpop.f32.mrf.mxu0
    %v103 = vadd.f32 0.0, %v102
    %v104 = vpop.f32.mrf.mxu0
    %105 = vdwg.mxu0
    %v106 = vld [vmem:[%s2] sm:$0xff]
    %v107 = vld [vmem:[%s2 + $0x8] sm:$0xff]
    %v108 = vld [vmem:[%s2 + $0x10] sm:$0xff]
    %v109 = vld [vmem:[%s2 + $0x18] sm:$0xff]
    %110 = vmatprep.subr.mxu0 0.0
    %111 = vmatpush1.msra.mxu0 0.0
    %112 = vmatprep.subr.mxu0 0.0
    %113 = vmatpush1.msra.mxu0 0.0
    %114 = vmatprep.subr.mxu0 0.0
    %115 = vmatpush1.msra.mxu0 0.0
    %116 = vmatprep.subr.mxu0 0.0
    %117 = vmatpush1.msra.mxu0 0.0
    %118 = vmatprep.subr.mxu0 0.0
    %119 = vmatpush1.msra.mxu0 0.0
    %120 = vmatprep.subr.mxu0 0.0
    %121 = vmatpush1.msra.mxu0 0.0
    %122 = vmatprep.subr.mxu0 0.0
    %123 = vmatpush1.msra.mxu0 0.0
    %124 = vmatprep.subr.mxu0 0.0
    %125 = vmatpush1.msra.mxu0 0.0
    %126 = vmatprep.subr.mxu0 0.0
    %127 = vmatpush1.msra.mxu0 0.0
    %128 = vmatprep.subr.mxu0 0.0
    %129 = vmatpush1.msra.mxu0 0.0
    %130 = vmatprep.subr.mxu0 0.0
    %131 = vmatpush1.msra.mxu0 0.0
    %132 = vmatprep.subr.mxu0 0.0
    %133 = vmatpush1.msra.mxu0 0.0
    %134 = vmatprep.subr.mxu0 0.0
    %135 = vmatpush1.msra.mxu0 %v109
    %136 = vmatprep.subr.mxu0 0.0
    %137 = vmatpush1.msra.mxu0 %v108
    %138 = vmatprep.subr.mxu0 0.0
    %139 = vmatpush1.msra.mxu0 %v107
    %140 = vmatprep.subr.mxu0 0.0
    %141 = vmatpush1.msra.mxu0 %v106
    %142 = vmatprep.subr.mxu0 0.0
    %143 = vmatpush2.msra.mxu0 0.0
    %144 = vmatprep.subr.mxu0 0.0
    %145 = vmatpush2.msra.mxu0 0.0
    %146 = vmatprep.subr.mxu0 0.0
    %147 = vmatpush2.msra.mxu0 0.0
    %148 = vmatprep.subr.mxu0 0.0
    %149 = vmatpush2.msra.mxu0 0.0
    %150 = vmatprep.subr.mxu0 0.0
    %151 = vmatpush2.msra.mxu0 0.0
    %152 = vmatprep.subr.mxu0 0.0
    %153 = vmatpush2.msra.mxu0 0.0
    %154 = vmatprep.subr.mxu0 0.0
    %155 = vmatpush2.msra.mxu0 0.0
    %156 = vmatprep.subr.mxu0 0.0
    %157 = vmatpush2.msra.mxu0 0.0
    %158 = vmatprep.subr.mxu0 0.0
    %159 = vmatpush2.msra.mxu0 0.0
    %160 = vmatprep.subr.mxu0 0.0
    %161 = vmatpush2.msra.mxu0 0.0
    %162 = vmatprep.subr.mxu0 0.0
    %163 = vmatpush2.msra.mxu0 0.0
    %164 = vmatprep.subr.mxu0 0.0
    %165 = vmatpush2.msra.mxu0 0.0
    %166 = vmatprep.subr.mxu0 0.0
    %167 = vmatpush2.msra.mxu0 0.0
    %168 = vmatprep.subr.mxu0 0.0
    %169 = vmatpush2.msra.mxu0 0.0
    %170 = vmatprep.subr.mxu0 0.0
    %171 = vmatpush2.msra.mxu0 0.0
    %172 = vmatprep.subr.mxu0 0.0
    %173 = vmatpush2.msra.mxu0 0.0
    %174 = vmatprep.mubr.f32.mxu0 0.0
    %175 = vmatmul.mubr.f32.gmra.mxu0 %v26
    %v176 = vpop.f32.mrf.mxu0
    %v177 = vadd.f32 0.0, %v176
    %v178 = vpop.f32.mrf.mxu0
    %179 = vmatprep.mubr.f32.mxu0 0.0
    %180 = vmatmul.mubr.f32.gmra.mxu0 %v29
    %v181 = vpop.f32.mrf.mxu0
    %v182 = vadd.f32 0.0, %v181
    %v183 = vpop.f32.mrf.mxu0
    %184 = vdwg.mxu0
    %v185 = vld [vmem:[%s3] sm:$0xff]
    %v186 = vld [vmem:[%s3 + $0x8] sm:$0xff]
    %v187 = vld [vmem:[%s3 + $0x10] sm:$0xff]
    %v188 = vld [vmem:[%s3 + $0x18] sm:$0xff]
    %189 = vmatprep.subr.mxu0 0.0
    %190 = vmatpush1.msra.mxu0 0.0
    %191 = vmatprep.subr.mxu0 0.0
    %192 = vmatpush1.msra.mxu0 0.0
    %193 = vmatprep.subr.mxu0 0.0
    %194 = vmatpush1.msra.mxu0 0.0
    %195 = vmatprep.subr.mxu0 0.0
    %196 = vmatpush1.msra.mxu0 0.0
    %197 = vmatprep.subr.mxu0 0.0
    %198 = vmatpush1.msra.mxu0 0.0
    %199 = vmatprep.subr.mxu0 0.0
    %200 = vmatpush1.msra.mxu0 0.0
    %201 = vmatprep.subr.mxu0 0.0
    %202 = vmatpush1.msra.mxu0 0.0
    %203 = vmatprep.subr.mxu0 0.0
    %204 = vmatpush1.msra.mxu0 0.0
    %205 = vmatprep.subr.mxu0 0.0
    %206 = vmatpush1.msra.mxu0 0.0
    %207 = vmatprep.subr.mxu0 0.0
    %208 = vmatpush1.msra.mxu0 0.0
    %209 = vmatprep.subr.mxu0 0.0
    %210 = vmatpush1.msra.mxu0 0.0
    %211 = vmatprep.subr.mxu0 0.0
    %212 = vmatpush1.msra.mxu0 0.0
    %213 = vmatprep.subr.mxu0 0.0
    %214 = vmatpush1.msra.mxu0 %v188
    %215 = vmatprep.subr.mxu0 0.0
    %216 = vmatpush1.msra.mxu0 %v187
    %217 = vmatprep.subr.mxu0 0.0
    %218 = vmatpush1.msra.mxu0 %v186
    %219 = vmatprep.subr.mxu0 0.0
    %220 = vmatpush1.msra.mxu0 %v185
    %221 = vmatprep.subr.mxu0 0.0
    %222 = vmatpush2.msra.mxu0 0.0
    %223 = vmatprep.subr.mxu0 0.0
    %224 = vmatpush2.msra.mxu0 0.0
    %225 = vmatprep.subr.mxu0 0.0
    %226 = vmatpush2.msra.mxu0 0.0
    %227 = vmatprep.subr.mxu0 0.0
    %228 = vmatpush2.msra.mxu0 0.0
    %229 = vmatprep.subr.mxu0 0.0
    %230 = vmatpush2.msra.mxu0 0.0
    %231 = vmatprep.subr.mxu0 0.0
    %232 = vmatpush2.msra.mxu0 0.0
    %233 = vmatprep.subr.mxu0 0.0
    %234 = vmatpush2.msra.mxu0 0.0
    %235 = vmatprep.subr.mxu0 0.0
    %236 = vmatpush2.msra.mxu0 0.0
    %237 = vmatprep.subr.mxu0 0.0
    %238 = vmatpush2.msra.mxu0 0.0
    %239 = vmatprep.subr.mxu0 0.0
    %240 = vmatpush2.msra.mxu0 0.0
    %241 = vmatprep.subr.mxu0 0.0
    %242 = vmatpush2.msra.mxu0 0.0
    %243 = vmatprep.subr.mxu0 0.0
    %244 = vmatpush2.msra.mxu0 0.0
    %245 = vmatprep.subr.mxu0 0.0
    %246 = vmatpush2.msra.mxu0 0.0
    %247 = vmatprep.subr.mxu0 0.0
    %248 = vmatpush2.msra.mxu0 0.0
    %249 = vmatprep.subr.mxu0 0.0
    %250 = vmatpush2.msra.mxu0 0.0
    %251 = vmatprep.subr.mxu0 0.0
    %252 = vmatpush2.msra.mxu0 0.0
    %253 = vmatprep.mubr.f32.mxu0 0.0
    %254 = vmatmul.mubr.f32.gmra.mxu0 %v26
    %v255 = vpop.f32.mrf.mxu0
    %v256 = vadd.f32 0.0, %v255
    %v257 = vpop.f32.mrf.mxu0
    %258 = vmatprep.mubr.f32.mxu0 0.0
    %259 = vmatmul.mubr.f32.gmra.mxu0 %v29
    %v260 = vpop.f32.mrf.mxu0
    %v261 = vadd.f32 0.0, %v260
    %v262 = vpop.f32.mrf.mxu0
    %263 = vdwg.mxu0
    %vm264 = vcmask 130048
    %v266 = vsel %vm264, %v98, 0
    %v269 = vsel %vm264, %v177, 0
    %271 = vmatprep.subr.mxu0 0.0
    %272 = vmatpush1.xpose.msra.mxu0 0.0
    %273 = vmatprep.subr.mxu0 0.0
    %274 = vmatpush1.xpose.msra.mxu0 0.0
    %275 = vmatprep.subr.mxu0 0.0
    %276 = vmatpush1.xpose.msra.mxu0 0.0
    %277 = vmatprep.subr.mxu0 0.0
    %278 = vmatpush1.xpose.msra.mxu0 0.0
    %279 = vmatprep.subr.mxu0 0.0
    %280 = vmatpush1.xpose.msra.mxu0 0.0
    %281 = vmatprep.subr.mxu0 0.0
    %282 = vmatpush1.xpose.msra.mxu0 0.0
    %283 = vmatprep.subr.mxu0 0.0
    %284 = vmatpush1.xpose.msra.mxu0 0.0
    %285 = vmatprep.subr.mxu0 0.0
    %286 = vmatpush1.xpose.msra.mxu0 0.0
    %287 = vmatprep.subr.mxu0 0.0
    %288 = vmatpush1.xpose.msra.mxu0 0.0
    %289 = vmatprep.subr.mxu0 0.0
    %290 = vmatpush1.xpose.msra.mxu0 0.0
    %291 = vmatprep.subr.mxu0 0.0
    %292 = vmatpush1.xpose.msra.mxu0 0.0
    %293 = vmatprep.subr.mxu0 0.0
    %294 = vmatpush1.xpose.msra.mxu0 0.0
    %295 = vmatprep.subr.mxu0 0.0
    %296 = vmatpush1.xpose.msra.mxu0 0.0
    %297 = vmatprep.subr.mxu0 0.0
    %298 = vmatpush1.xpose.msra.mxu0 0.0
    %299 = vmatprep.subr.mxu0 0.0
    %300 = vmatpush1.xpose.msra.mxu0 0.0
    %301 = vmatprep.subr.mxu0 0.0
    %302 = vmatpush1.xpose.msra.mxu0 %v269
    %303 = vmatprep.subr.mxu0 0.0
    %304 = vmatpush2.xpose.msra.mxu0 0.0
    %305 = vmatprep.subr.mxu0 0.0
    %306 = vmatpush2.xpose.msra.mxu0 0.0
    %307 = vmatprep.subr.mxu0 0.0
    %308 = vmatpush2.xpose.msra.mxu0 0.0
    %309 = vmatprep.subr.mxu0 0.0
    %310 = vmatpush2.xpose.msra.mxu0 0.0
    %311 = vmatprep.subr.mxu0 0.0
    %312 = vmatpush2.xpose.msra.mxu0 0.0
    %313 = vmatprep.subr.mxu0 0.0
    %314 = vmatpush2.xpose.msra.mxu0 0.0
    %315 = vmatprep.subr.mxu0 0.0
    %316 = vmatpush2.xpose.msra.mxu0 0.0
    %317 = vmatprep.subr.mxu0 0.0
    %318 = vmatpush2.xpose.msra.mxu0 0.0
    %319 = vmatprep.subr.mxu0 0.0
    %320 = vmatpush2.xpose.msra.mxu0 0.0
    %321 = vmatprep.subr.mxu0 0.0
    %322 = vmatpush2.xpose.msra.mxu0 0.0
    %323 = vmatprep.subr.mxu0 0.0
    %324 = vmatpush2.xpose.msra.mxu0 0.0
    %325 = vmatprep.subr.mxu0 0.0
    %326 = vmatpush2.xpose.msra.mxu0 0.0
    %327 = vmatprep.subr.mxu0 0.0
    %328 = vmatpush2.xpose.msra.mxu0 0.0
    %329 = vmatprep.subr.mxu0 0.0
    %330 = vmatpush2.xpose.msra.mxu0 0.0
    %331 = vmatprep.subr.mxu0 0.0
    %332 = vmatpush2.xpose.msra.mxu0 0.0
    %333 = vmatprep.subr.mxu0 0.0
    %334 = vmatpush2.xpose.msra.mxu0 0.0
    %335 = vmatprep.mubr.f32.mxu0 0.0
    %336 = vmatmul.mubr.f32.gmra.mxu0 %v266
    %v337 = vpop.f32.mrf.mxu0
    %v338 = vadd.f32 0.0, %v337
    %v339 = vpop.f32.mrf.mxu0
    %340 = vdwg.mxu0
    %v342 = vsel %vm264, %v103, 0
    %v345 = vsel %vm264, %v182, 0
    %347 = vmatprep.subr.mxu0 0.0
    %348 = vmatpush1.xpose.msra.mxu0 0.0
    %349 = vmatprep.subr.mxu0 0.0
    %350 = vmatpush1.xpose.msra.mxu0 0.0
    %351 = vmatprep.subr.mxu0 0.0
    %352 = vmatpush1.xpose.msra.mxu0 0.0
    %353 = vmatprep.subr.mxu0 0.0
    %354 = vmatpush1.xpose.msra.mxu0 0.0
    %355 = vmatprep.subr.mxu0 0.0
    %356 = vmatpush1.xpose.msra.mxu0 0.0
    %357 = vmatprep.subr.mxu0 0.0
    %358 = vmatpush1.xpose.msra.mxu0 0.0
    %359 = vmatprep.subr.mxu0 0.0
    %360 = vmatpush1.xpose.msra.mxu0 0.0
    %361 = vmatprep.subr.mxu0 0.0
    %362 = vmatpush1.xpose.msra.mxu0 0.0
    %363 = vmatprep.subr.mxu0 0.0
    %364 = vmatpush1.xpose.msra.mxu0 0.0
    %365 = vmatprep.subr.mxu0 0.0
    %366 = vmatpush1.xpose.msra.mxu0 0.0
    %367 = vmatprep.subr.mxu0 0.0
    %368 = vmatpush1.xpose.msra.mxu0 0.0
    %369 = vmatprep.subr.mxu0 0.0
    %370 = vmatpush1.xpose.msra.mxu0 0.0
    %371 = vmatprep.subr.mxu0 0.0
    %372 = vmatpush1.xpose.msra.mxu0 0.0
    %373 = vmatprep.subr.mxu0 0.0
    %374 = vmatpush1.xpose.msra.mxu0 0.0
    %375 = vmatprep.subr.mxu0 0.0
    %376 = vmatpush1.xpose.msra.mxu0 0.0
    %377 = vmatprep.subr.mxu0 0.0
    %378 = vmatpush1.xpose.msra.mxu0 %v345
    %379 = vmatprep.subr.mxu0 0.0
    %380 = vmatpush2.xpose.msra.mxu0 0.0
    %381 = vmatprep.subr.mxu0 0.0
    %382 = vmatpush2.xpose.msra.mxu0 0.0
    %383 = vmatprep.subr.mxu0 0.0
    %384 = vmatpush2.xpose.msra.mxu0 0.0
    %385 = vmatprep.subr.mxu0 0.0
    %386 = vmatpush2.xpose.msra.mxu0 0.0
    %387 = vmatprep.subr.mxu0 0.0
    %388 = vmatpush2.xpose.msra.mxu0 0.0
    %389 = vmatprep.subr.mxu0 0.0
    %390 = vmatpush2.xpose.msra.mxu0 0.0
    %391 = vmatprep.subr.mxu0 0.0
    %392 = vmatpush2.xpose.msra.mxu0 0.0
    %393 = vmatprep.subr.mxu0 0.0
    %394 = vmatpush2.xpose.msra.mxu0 0.0
    %395 = vmatprep.subr.mxu0 0.0
    %396 = vmatpush2.xpose.msra.mxu0 0.0
    %397 = vmatprep.subr.mxu0 0.0
    %398 = vmatpush2.xpose.msra.mxu0 0.0
    %399 = vmatprep.subr.mxu0 0.0
    %400 = vmatpush2.xpose.msra.mxu0 0.0
    %401 = vmatprep.subr.mxu0 0.0
    %402 = vmatpush2.xpose.msra.mxu0 0.0
    %403 = vmatprep.subr.mxu0 0.0
    %404 = vmatpush2.xpose.msra.mxu0 0.0
    %405 = vmatprep.subr.mxu0 0.0
    %406 = vmatpush2.xpose.msra.mxu0 0.0
    %407 = vmatprep.subr.mxu0 0.0
    %408 = vmatpush2.xpose.msra.mxu0 0.0
    %409 = vmatprep.subr.mxu0 0.0
    %410 = vmatpush2.xpose.msra.mxu0 0.0
    %411 = vmatprep.mubr.f32.mxu0 0.0
    %412 = vmatmul.mubr.f32.gmra.mxu0 %v342
    %v413 = vpop.f32.mrf.mxu0
    %v414 = vadd.f32 0.0, %v413
    %v415 = vpop.f32.mrf.mxu0
    %416 = vdwg.mxu0
    %v417 = vmul.f32 %v338, 0.17677669
    %v418 = vmul.f32 %v414, 0.17677669
    %v419 = vlaneseq
    %v420 = vshrl.u32 %v419, 7
    %v421 = vlaneseq
    %v422 = vand.u32 %v421, 127
    %vm423 = vcmp.ge.s32.totalorder %v420, %v422
    %v424 = vsel %vm423, 1, 0
    %vm425 = vcmp.eq.s32.totalorder %v424, 1
    %v426 = vsel %vm425, %v417, -inf
    %v427 = vsel %vm425, %v418, -inf
    %vm428 = vcmask 64512
    %v429 = vsel %vm428, %v426, -inf
    %430 = vmax.xlane.f32.xlu0 %v429
    %v431 = vpop.xlane.xlu0 %430
    %v432 = vsel %vm428, %v427, -inf
    %433 = vmax.xlane.f32.xlu0 %v432
    %v434 = vpop.xlane.xlu0 %433
    %v435 = vsub.f32 %v426, %v431
    %v436 = vsub.f32 %v427, %v434
    %v437 = vmul.f32 %v435, 1.442695
    %v438 = vpow.pop %v437
    %v439 = vmul.f32 %v436, 1.442695
    %v440 = vpow.pop %v439
    %v441 = vsel %vm428, %v438, 0.0
    %442 = vadd.xlane.f32.xlu0 %v441
    %v443 = vpop.xlane.xlu0 %442
    %v444 = vsel %vm428, %v440, 0.0
    %445 = vadd.xlane.f32.xlu0 %v444
    %v446 = vpop.xlane.xlu0 %445
    %v447 = vrcp.pop %v443
    %v448 = vmul.f32 %v438, %v447
    %v449 = vrcp.pop %v446
    %v450 = vmul.f32 %v440, %v449
    %v452 = vsel %vm428, %v448, 0
    %454 = vmatprep.subr.mxu0 0.0
    %455 = vmatpush1.msra.mxu0 0.0
    %456 = vmatprep.subr.mxu0 0.0
    %457 = vmatpush1.msra.mxu0 0.0
    %458 = vmatprep.subr.mxu0 0.0
    %459 = vmatpush1.msra.mxu0 0.0
    %460 = vmatprep.subr.mxu0 0.0
    %461 = vmatpush1.msra.mxu0 0.0
    %462 = vmatprep.subr.mxu0 0.0
    %463 = vmatpush1.msra.mxu0 0.0
    %464 = vmatprep.subr.mxu0 0.0
    %465 = vmatpush1.msra.mxu0 0.0
    %466 = vmatprep.subr.mxu0 0.0
    %467 = vmatpush1.msra.mxu0 0.0
    %468 = vmatprep.subr.mxu0 0.0
    %469 = vmatpush1.msra.mxu0 0.0
    %470 = vmatprep.subr.mxu0 0.0
    %471 = vmatpush1.msra.mxu0 0.0
    %472 = vmatprep.subr.mxu0 0.0
    %473 = vmatpush1.msra.mxu0 0.0
    %474 = vmatprep.subr.mxu0 0.0
    %475 = vmatpush1.msra.mxu0 0.0
    %476 = vmatprep.subr.mxu0 0.0
    %477 = vmatpush1.msra.mxu0 0.0
    %478 = vmatprep.subr.mxu0 0.0
    %479 = vmatpush1.msra.mxu0 0.0
    %480 = vmatprep.subr.mxu0 0.0
    %481 = vmatpush1.msra.mxu0 0.0
    %482 = vmatprep.subr.mxu0 0.0
    %483 = vmatpush1.msra.mxu0 0.0
    %484 = vmatprep.subr.mxu0 0.0
    %485 = vmatpush1.msra.mxu0 %v256
    %486 = vmatprep.subr.mxu0 0.0
    %487 = vmatpush2.msra.mxu0 0.0
    %488 = vmatprep.subr.mxu0 0.0
    %489 = vmatpush2.msra.mxu0 0.0
    %490 = vmatprep.subr.mxu0 0.0
    %491 = vmatpush2.msra.mxu0 0.0
    %492 = vmatprep.subr.mxu0 0.0
    %493 = vmatpush2.msra.mxu0 0.0
    %494 = vmatprep.subr.mxu0 0.0
    %495 = vmatpush2.msra.mxu0 0.0
    %496 = vmatprep.subr.mxu0 0.0
    %497 = vmatpush2.msra.mxu0 0.0
    %498 = vmatprep.subr.mxu0 0.0
    %499 = vmatpush2.msra.mxu0 0.0
    %500 = vmatprep.subr.mxu0 0.0
    %501 = vmatpush2.msra.mxu0 0.0
    %502 = vmatprep.subr.mxu0 0.0
    %503 = vmatpush2.msra.mxu0 0.0
    %504 = vmatprep.subr.mxu0 0.0
    %505 = vmatpush2.msra.mxu0 0.0
    %506 = vmatprep.subr.mxu0 0.0
    %507 = vmatpush2.msra.mxu0 0.0
    %508 = vmatprep.subr.mxu0 0.0
    %509 = vmatpush2.msra.mxu0 0.0
    %510 = vmatprep.subr.mxu0 0.0
    %511 = vmatpush2.msra.mxu0 0.0
    %512 = vmatprep.subr.mxu0 0.0
    %513 = vmatpush2.msra.mxu0 0.0
    %514 = vmatprep.subr.mxu0 0.0
    %515 = vmatpush2.msra.mxu0 0.0
    %516 = vmatprep.subr.mxu0 0.0
    %517 = vmatpush2.msra.mxu0 0.0
    %518 = vmatprep.mubr.f32.mxu0 0.0
    %519 = vmatmul.mubr.f32.gmra.mxu0 %v452
    %v520 = vpop.f32.mrf.mxu0
    %v521 = vadd.f32 0.0, %v520
    %v522 = vpop.f32.mrf.mxu0
    %523 = vdwg.mxu0
    %v525 = vsel %vm428, %v450, 0
    %527 = vmatprep.subr.mxu0 0.0
    %528 = vmatpush1.msra.mxu0 0.0
    %529 = vmatprep.subr.mxu0 0.0
    %530 = vmatpush1.msra.mxu0 0.0
    %531 = vmatprep.subr.mxu0 0.0
    %532 = vmatpush1.msra.mxu0 0.0
    %533 = vmatprep.subr.mxu0 0.0
    %534 = vmatpush1.msra.mxu0 0.0
    %535 = vmatprep.subr.mxu0 0.0
    %536 = vmatpush1.msra.mxu0 0.0
    %537 = vmatprep.subr.mxu0 0.0
    %538 = vmatpush1.msra.mxu0 0.0
    %539 = vmatprep.subr.mxu0 0.0
    %540 = vmatpush1.msra.mxu0 0.0
    %541 = vmatprep.subr.mxu0 0.0
    %542 = vmatpush1.msra.mxu0 0.0
    %543 = vmatprep.subr.mxu0 0.0
    %544 = vmatpush1.msra.mxu0 0.0
    %545 = vmatprep.subr.mxu0 0.0
    %546 = vmatpush1.msra.mxu0 0.0
    %547 = vmatprep.subr.mxu0 0.0
    %548 = vmatpush1.msra.mxu0 0.0
    %549 = vmatprep.subr.mxu0 0.0
    %550 = vmatpush1.msra.mxu0 0.0
    %551 = vmatprep.subr.mxu0 0.0
    %552 = vmatpush1.msra.mxu0 0.0
    %553 = vmatprep.subr.mxu0 0.0
    %554 = vmatpush1.msra.mxu0 0.0
    %555 = vmatprep.subr.mxu0 0.0
    %556 = vmatpush1.msra.mxu0 0.0
    %557 = vmatprep.subr.mxu0 0.0
    %558 = vmatpush1.msra.mxu0 %v261
    %559 = vmatprep.subr.mxu0 0.0
    %560 = vmatpush2.msra.mxu0 0.0
    %561 = vmatprep.subr.mxu0 0.0
    %562 = vmatpush2.msra.mxu0 0.0
    %563 = vmatprep.subr.mxu0 0.0
    %564 = vmatpush2.msra.mxu0 0.0
    %565 = vmatprep.subr.mxu0 0.0
    %566 = vmatpush2.msra.mxu0 0.0
    %567 = vmatprep.subr.mxu0 0.0
    %568 = vmatpush2.msra.mxu0 0.0
    %569 = vmatprep.subr.mxu0 0.0
    %570 = vmatpush2.msra.mxu0 0.0
    %571 = vmatprep.subr.mxu0 0.0
    %572 = vmatpush2.msra.mxu0 0.0
    %573 = vmatprep.subr.mxu0 0.0
    %574 = vmatpush2.msra.mxu0 0.0
    %575 = vmatprep.subr.mxu0 0.0
    %576 = vmatpush2.msra.mxu0 0.0
    %577 = vmatprep.subr.mxu0 0.0
    %578 = vmatpush2.msra.mxu0 0.0
    %579 = vmatprep.subr.mxu0 0.0
    %580 = vmatpush2.msra.mxu0 0.0
    %581 = vmatprep.subr.mxu0 0.0
    %582 = vmatpush2.msra.mxu0 0.0
    %583 = vmatprep.subr.mxu0 0.0
    %584 = vmatpush2.msra.mxu0 0.0
    %585 = vmatprep.subr.mxu0 0.0
    %586 = vmatpush2.msra.mxu0 0.0
    %587 = vmatprep.subr.mxu0 0.0
    %588 = vmatpush2.msra.mxu0 0.0
    %589 = vmatprep.subr.mxu0 0.0
    %590 = vmatpush2.msra.mxu0 0.0
    %591 = vmatprep.mubr.f32.mxu0 0.0
    %592 = vmatmul.mubr.f32.gmra.mxu0 %v525
    %v593 = vpop.f32.mrf.mxu0
    %v594 = vadd.f32 0.0, %v593
    %v595 = vpop.f32.mrf.mxu0
    %596 = vdwg.mxu0
    %597 = vst.msk [vmem:[#allocation2] sm:$0xff] %vm264, %v521
    %598 = vst.msk [vmem:[#allocation2 + $0x8] sm:$0xff] %vm264, %v594
    // Predicated region
    $region18: #{head_forward.1} parent=1 // pred_check
      _
    $region19: #{head_forward.1} parent=1 // pred_check_branch
      %600 = sbr.rel (0) target = $region21
    $region20: #{head_forward.1} parent=1 // pred_region
      %s602 = ssub.s32 256, 256
      %603 = vsyncadd [#allocation3], %s602
      %s604 = sshll.u32 [#allocation2], 4
      %s605 = int_to_ptr.vmem [resolvable:$true] %s604
      %610 = dma.vmem_to_hbm [thread:$0]  %s605, 256, %s4, [#allocation3], 128, 128, 8
    $region21: #{head_forward.1} parent=1 // pred_fallthru
      _
    // Predicated region
    $region22: #{head_forward.1} parent=1 // pred_check
      _
    $region23: #{head_forward.1} parent=1 // pred_check_branch
      %612 = sbr.rel (0) target = $region25
    $region24: #{head_forward.1} parent=1 // pred_region
      %613 = dma.done [#allocation3], 256
    $region25: #{head_forward.1} parent=1 // pred_fallthru
      _
    %614 = vsyncpa [#allocation3], 1

</llo_original>
